<compile_context>
chip_gen: v5e
topology: v5e:2x2
jax: 0.10.0
libtpu: 0.0.40
codegen_flags: <defaults>
</compile_context>

<pallas_src>
import jax
import jax.numpy as jnp
from jax import lax
from jax.experimental import pallas as pl
from jax.experimental.pallas import tpu as pltpu

_PAD = 8  # zero rows before/after each sample inside the flattened buffer


def _shift_down(x, k):
    """out[r] = x[r-k] (rows move toward larger indices); zero-filled at top."""
    z = jnp.zeros((k,) + x.shape[1:], x.dtype)
    return jnp.concatenate([z, x[:-k]], axis=0)


def _shift_up(x, k):
    """out[r] = x[r+k]; zero-filled at the bottom."""
    z = jnp.zeros((k,) + x.shape[1:], x.dtype)
    return jnp.concatenate([x[k:], z], axis=0)


# ---------------------------------------------------------------------------
# Fused kernel: conv1+pool -> conv2+pool -> LSTM (last hidden) -> FC
# for one batch block of BB samples (whole batch if grid == 1).
# ---------------------------------------------------------------------------
def cnn_lstm_kernel(x_ref, w1_ref, b1_ref, w2c_ref, b2_ref,
                    wih_ref, whh_ref, bl_ref, wfc_ref, bfc_ref,
                    o_ref, xpad):
    BB, L, _ = x_ref.shape
    H = whh_ref.shape[0]
    Lslot = L + 2 * _PAD          # rows reserved per sample in the flat buffer
    N = BB * Lslot                # total flattened rows
    T = (L // 2) // 2             # LSTM sequence length (two MaxPool(2) floors)

    # ---- Stage 0: all BB samples into ONE zero-gapped flat buffer ----------
    # The zero gaps implement Conv1d(padding=1) borders for every sample.
    xpad[...] = jnp.zeros_like(xpad)
    for b in range(BB):           # BB <= 2: one or two aligned stores
        xpad[pl.ds(b * Lslot + _PAD, L), :] = x_ref[b]
    xall = xpad[...]                                            # (N, Cin)

    # ---- Conv1 (k=3, padding=1) + ReLU over ALL samples at once ------------
    y1 = (jnp.dot(_shift_down(xall, 1), w1_ref[0],
                  preferred_element_type=jnp.float32)           # x[l-1] @ w[0]
          + jnp.dot(xall, w1_ref[1], preferred_element_type=jnp.float32)
          + jnp.dot(_shift_up(xall, 1), w1_ref[2],
                    preferred_element_type=jnp.float32)         # x[l+1] @ w[2]
          + b1_ref[...])
    y1 = jnp.maximum(y1, 0.0)                                   # (N, 32)

    # ---- MaxPool1 (k=2, s=2), kept in a stride-2 row representation --------
    p1 = jnp.maximum(y1, _shift_up(y1, 1))        # p1[r] = max(y1[r], y1[r+1])
    # Zero all rows outside each sample's valid window so they act as conv2's
    # padding=1 zeros (cheap iota compare + where; no extra scratch).
    ri = lax.broadcasted_iota(jnp.int32, (N, 1), 0)
    valid = (ri >= _PAD) & (ri < _PAD + L)
    for b in range(1, BB):
        lo = b * Lslot + _PAD
        valid = valid | ((ri >= lo) & (ri < lo + L))
    p1 = jnp.where(valid, p1, 0.0)                              # (N, 32)

    # ---- Conv2 (k=3, padding=1) + ReLU: single im2col matmul ---------------
    # Consecutive timesteps are 2 rows apart, so the taps are +/-2-row shifts.
    cat = jnp.concatenate(
        [_shift_down(p1, 2), p1, _shift_up(p1, 2)], axis=1)     # (N, 96)
    y2 = jnp.maximum(
        jnp.dot(cat, w2c_ref[...], preferred_element_type=jnp.float32)
        + b2_ref[...], 0.0)                                     # (N, 64)

    # ---- MaxPool2, stride-4 row representation ------------------------------
    p2 = jnp.maximum(y2, _shift_up(y2, 2))                      # (N, 64)

    # ---- Hoisted LSTM input projection: all samples & timesteps, ONE matmul -
    gx = (jnp.dot(p2, wih_ref[...], preferred_element_type=jnp.float32)
          + bl_ref[...])                                        # (N, 4H), in regs

    # ---- LSTM recurrence (T tiny -> static unroll) ---------------------------
    whh = whh_ref[...]
    lane = lax.broadcasted_iota(jnp.int32, (1, 4 * H), 1)
    g_mask = (lane >= 2 * H) & (lane < 3 * H)       # tanh lanes (gate g)
    h = jnp.zeros((BB, H), jnp.float32)
    c = jnp.zeros((BB, H), jnp.float32)
    for t in range(T):
        # Timestep t for sample b lives at flat row b*Lslot + PAD + 4*t.
        rows = []
        for b in range(BB):
            r0 = b * Lslot + _PAD + 4 * t
            rows.append(gx[r0:r0 + 1, :])
        gxt = rows[0] if BB == 1 else jnp.concatenate(rows, axis=0)  # (BB, 4H)
        gates = gxt + jnp.dot(h, whh, preferred_element_type=jnp.float32)
        # One sigmoid + one tanh over the full 4H lanes, lane-mask select.
        act = jnp.where(g_mask, jnp.tanh(gates), jax.nn.sigmoid(gates))
        i_g = act[:, 0:H]                    # PyTorch gate order i, f, g, o
        f_g = act[:, H:2 * H]
        g_g = act[:, 2 * H:3 * H]
        o_g = act[:, 3 * H:4 * H]
        c = f_g * c + i_g * g_g
        h = o_g * jnp.tanh(c)

    # ---- FC (H -> 1) on VPU/XLU: broadcast-multiply + lane reduce ------------
    o_ref[...] = (jnp.sum(h * wfc_ref[...], axis=1, keepdims=True)
                  + bfc_ref[...])


# ---------------------------------------------------------------------------
# Wrapper: one pallas_call, batch split over a "parallel" grid (2 blocks when
# possible so v7x's second TensorCore is used; harmless on v5e/v6e).
# ---------------------------------------------------------------------------
def cnn_lstm_forward(x, params, *, batch_blocks=None):
    B, L, Cin = x.shape
    C1 = params["b1"].shape[-1]
    C2 = params["b2"].shape[-1]
    H = params["whh_t"].shape[0]

    if batch_blocks is None:
        batch_blocks = 2 if (B >= 2 and B % 2 == 0) else 1
    G = batch_blocks
    assert B % G == 0, "batch must divide evenly into batch_blocks"
    BB = B // G
    Lslot = L + 2 * _PAD

    w1 = params["w1"]                          # (3, Cin, 32)
    b1 = params["b1"].reshape(1, C1)
    w2cat = params["w2"].reshape(3 * C1, C2)   # im2col weight (96, 64)
    b2 = params["b2"].reshape(1, C2)
    wih = params["wih_t"]                      # (64, 4H)
    whh = params["whh_t"]                      # (H, 4H)
    bl = params["b_lstm"].reshape(1, 4 * H)
    wfc = params["wfc_t"].reshape(1, H)
    bfc = params["bfc"].reshape(1, 1)

    def full(a):  # whole-array block, resident across all grid steps
        nd = a.ndim
        return pl.BlockSpec(a.shape, lambda i, _nd=nd: (0,) * _nd)

    out = pl.pallas_call(
        cnn_lstm_kernel,
        out_shape=jax.ShapeDtypeStruct((G, BB, 1), jnp.float32),
        grid=(G,),
        in_specs=[
            pl.BlockSpec((BB, L, Cin), lambda i: (i, 0, 0)),
            full(w1), full(b1), full(w2cat), full(b2),
            full(wih), full(whh), full(bl), full(wfc), full(bfc),
        ],
        out_specs=pl.BlockSpec((None, BB, 1), lambda i: (i, 0, 0)),
        scratch_shapes=[
            pltpu.VMEM((BB * Lslot, Cin), jnp.float32),   # zero-gapped conv input
        ],
        compiler_params=pltpu.CompilerParams(
            dimension_semantics=("parallel",),
            vmem_limit_bytes=32 * 1024 * 1024),
    )(x, w1, b1, w2cat, b2, wih, whh, bl, wfc, bfc)
    return out.reshape(B, 1)


# ---------------------------------------------------------------------------
# Parameters (conv weights (K, Cin, Cout); LSTM/FC weights pre-transposed;
# LSTM bias = b_ih + b_hh; gate order i, f, g, o).
# ---------------------------------------------------------------------------
def init_params(key, input_dim, hidden_dim):
    ks = jax.random.split(key, 8)
    scale = 0.1
    return {
        "w1": scale * jax.random.normal(ks[0], (3, input_dim, 32), jnp.float32),
        "b1": scale * jax.random.normal(ks[1], (32,), jnp.float32),
        "w2": scale * jax.random.normal(ks[2], (3, 32, 64), jnp.float32),
        "b2": scale * jax.random.normal(ks[3], (64,), jnp.float32),
        "wih_t": scale * jax.random.normal(ks[4], (64, 4 * hidden_dim), jnp.float32),
        "whh_t": scale * jax.random.normal(ks[5], (hidden_dim, 4 * hidden_dim), jnp.float32),
        "b_lstm": scale * jax.random.normal(ks[6], (1, 4 * hidden_dim), jnp.float32),
        "wfc_t": scale * jax.random.normal(ks[7], (hidden_dim, 1), jnp.float32),
        "bfc": jnp.zeros((1, 1), jnp.float32),
    }


# ---------------------------------------------------------------------------
# Pure-JAX reference (same math, no Pallas) for a correctness check.
# ---------------------------------------------------------------------------
def forward_ref(x, params):
    B, _, _ = x.shape
    H = params["whh_t"].shape[0]

    def conv_block(h, w, b):
        Lc = h.shape[1]
        hp = jnp.pad(h, ((0, 0), (1, 1), (0, 0)))
        y = (hp[:, 0:Lc] @ w[0] + hp[:, 1:Lc + 1] @ w[1]
             + hp[:, 2:Lc + 2] @ w[2] + b)
        y = jnp.maximum(y, 0.0)
        y = y[:, : 2 * (Lc // 2)]
        return jnp.max(y.reshape(B, Lc // 2, 2, -1), axis=2)

    h = conv_block(x, params["w1"], params["b1"])
    h = conv_block(h, params["w2"], params["b2"])
    T = h.shape[1]
    gx = h @ params["wih_t"] + params["b_lstm"]          # (B, T, 4H)
    hs = jnp.zeros((B, H), jnp.float32)
    cs = jnp.zeros((B, H), jnp.float32)
    for t in range(T):
        g = gx[:, t, :] + hs @ params["whh_t"]
        i_g = jax.nn.sigmoid(g[:, 0:H])
        f_g = jax.nn.sigmoid(g[:, H:2 * H])
        g_g = jnp.tanh(g[:, 2 * H:3 * H])
        o_g = jax.nn.sigmoid(g[:, 3 * H:4 * H])
        cs = f_g * cs + i_g * g_g
        hs = o_g * jnp.tanh(cs)
    return hs @ params["wfc_t"] + params["bfc"]


if __name__ == "__main__":
    B, SEQ, INPUT_DIM, HIDDEN = 2, 16, 4, 32

    key = jax.random.PRNGKey(0)
    k_x, k_p = jax.random.split(key)
    # x: (batch, seq_len, input_dim) — same as the PyTorch module's input
    x = jax.random.normal(k_x, (B, SEQ, INPUT_DIM), jnp.float32)
    params = init_params(k_p, INPUT_DIM, HIDDEN)

    ref = forward_ref(x, params)

    # Default path: batch split across a 2-step "parallel" grid (v7x: 2 TCs).
    out = jax.block_until_ready(cnn_lstm_forward(x, params))
    assert out.shape == (B, 1)
    err = float(jnp.max(jnp.abs(out - ref)))
    assert err < 5e-3, f"kernel (grid) vs reference mismatch: max abs err = {err}"

    # Single-block path: whole batch flattened into one matmul M dimension.
    out1 = jax.block_until_ready(cnn_lstm_forward(x, params, batch_blocks=1))
    err1 = float(jnp.max(jnp.abs(out1 - ref)))
    assert err1 < 5e-3, f"kernel (no grid) vs reference mismatch: max abs err = {err1}"

    print("KERNEL_OK")
</pallas_src>

<mosaic_0001>
module attributes {stable_mosaic.version = 11 : i64} {
  func.func @cnn_lstm_kernel(%arg0: i32, %arg1: memref<1x16x4xf32, #tpu.memory_space<vmem>>, %arg2: memref<3x4x32xf32, #tpu.memory_space<vmem>>, %arg3: memref<1x32xf32, #tpu.memory_space<vmem>>, %arg4: memref<96x64xf32, #tpu.memory_space<vmem>>, %arg5: memref<1x64xf32, #tpu.memory_space<vmem>>, %arg6: memref<64x128xf32, #tpu.memory_space<vmem>>, %arg7: memref<32x128xf32, #tpu.memory_space<vmem>>, %arg8: memref<1x128xf32, #tpu.memory_space<vmem>>, %arg9: memref<1x32xf32, #tpu.memory_space<vmem>>, %arg10: memref<1x1xf32, #tpu.memory_space<vmem>>, %arg11: memref<1x1x1xf32, #tpu.memory_space<vmem>>, %arg12: memref<32x4xf32, #tpu.memory_space<vmem>>) attributes {dimension_semantics = [#tpu.dimension_semantics<parallel>], iteration_bounds = array<i64: 2>, scalar_prefetch = 0 : i64, scratch_operands = 1 : i64, tpu.core_type = #tpu.core_type<tc>, window_params = [{transform_indices = @transform_0, window_bounds = array<i64: 1, 16, 4>}, {pipeline_mode = #tpu.pipeline_mode<synchronous>, transform_indices = @transform_1, window_bounds = array<i64: 3, 4, 32>}, {pipeline_mode = #tpu.pipeline_mode<synchronous>, transform_indices = @transform_2, window_bounds = array<i64: 1, 32>}, {pipeline_mode = #tpu.pipeline_mode<synchronous>, transform_indices = @transform_3, window_bounds = array<i64: 96, 64>}, {pipeline_mode = #tpu.pipeline_mode<synchronous>, transform_indices = @transform_4, window_bounds = array<i64: 1, 64>}, {pipeline_mode = #tpu.pipeline_mode<synchronous>, transform_indices = @transform_5, window_bounds = array<i64: 64, 128>}, {pipeline_mode = #tpu.pipeline_mode<synchronous>, transform_indices = @transform_6, window_bounds = array<i64: 32, 128>}, {pipeline_mode = #tpu.pipeline_mode<synchronous>, transform_indices = @transform_7, window_bounds = array<i64: 1, 128>}, {pipeline_mode = #tpu.pipeline_mode<synchronous>, transform_indices = @transform_8, window_bounds = array<i64: 1, 32>}, {pipeline_mode = #tpu.pipeline_mode<synchronous>, transform_indices = @transform_9, window_bounds = array<i64: 1, 1>}, {transform_indices = @transform_10, window_bounds = array<i64: 1, 1, 1>}]} {
    %cst = arith.constant 0.000000e+00 : f32
    %0 = vector.broadcast %cst : f32 to vector<32x4xf32>
    %c0 = arith.constant 0 : index
    %c0_0 = arith.constant 0 : index
    %1 = vector.load %arg12[%c0, %c0_0] : memref<32x4xf32, #tpu.memory_space<vmem>>, vector<32x4xf32>
    tpu.vector_store %arg12[%c0, %c0_0], %0 {strides = array<i32>} : memref<32x4xf32, #tpu.memory_space<vmem>>, vector<32x4xf32>,
    %c0_1 = arith.constant 0 : index
    %c0_2 = arith.constant 0 : index
    %c0_3 = arith.constant 0 : index
    %2 = vector.load %arg1[%c0_1, %c0_2, %c0_3] : memref<1x16x4xf32, #tpu.memory_space<vmem>>, vector<1x16x4xf32>
    %3 = vector.shape_cast %2 : vector<1x16x4xf32> to vector<16x4xf32>
    %c8 = arith.constant 8 : index
    %c0_4 = arith.constant 0 : index
    %4 = vector.load %arg12[%c8, %c0_4] : memref<32x4xf32, #tpu.memory_space<vmem>>, vector<16x4xf32>
    tpu.vector_store %arg12[%c8, %c0_4], %3 {strides = array<i32>} : memref<32x4xf32, #tpu.memory_space<vmem>>, vector<16x4xf32>,
    %c0_5 = arith.constant 0 : index
    %c0_6 = arith.constant 0 : index
    %5 = vector.load %arg12[%c0_5, %c0_6] : memref<32x4xf32, #tpu.memory_space<vmem>>, vector<32x4xf32>
    %cst_7 = arith.constant 0.000000e+00 : f32
    %6 = vector.broadcast %cst_7 : f32 to vector<1x4xf32>
    %7 = vector.extract_strided_slice %5 {offsets = [0, 0], sizes = [31, 4], strides = [1, 1]} : vector<32x4xf32> to vector<31x4xf32>
    %8 = tpu.concatenate %6, %7 in 0 : vector<1x4xf32>, vector<31x4xf32> -> vector<32x4xf32>
    %c0_8 = arith.constant 0 : index
    %c0_9 = arith.constant 0 : index
    %c0_10 = arith.constant 0 : index
    %9 = vector.load %arg2[%c0_8, %c0_9, %c0_10] : memref<3x4x32xf32, #tpu.memory_space<vmem>>, vector<1x4x32xf32>
    %10 = vector.shape_cast %9 : vector<1x4x32xf32> to vector<4x32xf32>
    %cst_11 = arith.constant dense<0.000000e+00> : vector<32x32xf32>
    %11 = tpu.matmul %8, %10, %cst_11 {dimension_numbers = #tpu.dot_dimension_numbers<[1], [0], [0], [1], [0, 0, 1, 1], [], []>} : vector<32x4xf32>, vector<4x32xf32>, vector<32x32xf32> -> vector<32x32xf32>
    %c1 = arith.constant 1 : index
    %c0_12 = arith.constant 0 : index
    %c0_13 = arith.constant 0 : index
    %12 = vector.load %arg2[%c1, %c0_12, %c0_13] : memref<3x4x32xf32, #tpu.memory_space<vmem>>, vector<1x4x32xf32>
    %13 = vector.shape_cast %12 : vector<1x4x32xf32> to vector<4x32xf32>
    %cst_14 = arith.constant dense<0.000000e+00> : vector<32x32xf32>
    %14 = tpu.matmul %5, %13, %cst_14 {dimension_numbers = #tpu.dot_dimension_numbers<[1], [0], [0], [1], [0, 0, 1, 1], [], []>} : vector<32x4xf32>, vector<4x32xf32>, vector<32x32xf32> -> vector<32x32xf32>
    %15 = arith.addf %11, %14 : vector<32x32xf32>
    %cst_15 = arith.constant 0.000000e+00 : f32
    %16 = vector.broadcast %cst_15 : f32 to vector<1x4xf32>
    %17 = vector.extract_strided_slice %5 {offsets = [1, 0], sizes = [31, 4], strides = [1, 1]} : vector<32x4xf32> to vector<31x4xf32>
    %18 = tpu.concatenate %17, %16 in 0 : vector<31x4xf32>, vector<1x4xf32> -> vector<32x4xf32>
    %c2 = arith.constant 2 : index
    %c0_16 = arith.constant 0 : index
    %c0_17 = arith.constant 0 : index
    %19 = vector.load %arg2[%c2, %c0_16, %c0_17] : memref<3x4x32xf32, #tpu.memory_space<vmem>>, vector<1x4x32xf32>
    %20 = vector.shape_cast %19 : vector<1x4x32xf32> to vector<4x32xf32>
    %cst_18 = arith.constant dense<0.000000e+00> : vector<32x32xf32>
    %21 = tpu.matmul %18, %20, %cst_18 {dimension_numbers = #tpu.dot_dimension_numbers<[1], [0], [0], [1], [0, 0, 1, 1], [], []>} : vector<32x4xf32>, vector<4x32xf32>, vector<32x32xf32> -> vector<32x32xf32>
    %22 = arith.addf %15, %21 : vector<32x32xf32>
    %c0_19 = arith.constant 0 : index
    %c0_20 = arith.constant 0 : index
    %23 = vector.load %arg3[%c0_19, %c0_20] : memref<1x32xf32, #tpu.memory_space<vmem>>, vector<1x32xf32>
    %24 = vector.broadcast %23 : vector<1x32xf32> to vector<32x32xf32>
    %25 = arith.addf %22, %24 : vector<32x32xf32>
    %cst_21 = arith.constant 0.000000e+00 : f32
    %26 = vector.broadcast %cst_21 : f32 to vector<32x32xf32>
    %27 = arith.maximumf %25, %26 : vector<32x32xf32>
    %cst_22 = arith.constant 0.000000e+00 : f32
    %28 = vector.broadcast %cst_22 : f32 to vector<1x32xf32>
    %29 = vector.extract_strided_slice %27 {offsets = [1, 0], sizes = [31, 32], strides = [1, 1]} : vector<32x32xf32> to vector<31x32xf32>
    %30 = tpu.concatenate %29, %28 in 0 : vector<31x32xf32>, vector<1x32xf32> -> vector<32x32xf32>
    %31 = arith.maximumf %27, %30 : vector<32x32xf32>
    %32 = tpu.iota {dimensions = array<i32: 0>} : vector<32x1xi32>
    %c8_i32 = arith.constant 8 : i32
    %33 = vector.broadcast %c8_i32 : i32 to vector<32x1xi32>
    %34 = arith.cmpi sge, %32, %33 : vector<32x1xi32>
    %c24_i32 = arith.constant 24 : i32
    %35 = vector.broadcast %c24_i32 : i32 to vector<32x1xi32>
    %36 = arith.cmpi slt, %32, %35 : vector<32x1xi32>
    %37 = arith.andi %34, %36 : vector<32x1xi1>
    %cst_23 = arith.constant 0.000000e+00 : f32
    %38 = vector.shape_cast %37 : vector<32x1xi1> to vector<32x1xi1>
    %39 = vector.broadcast %38 : vector<32x1xi1> to vector<32x32xi1>
    %40 = vector.broadcast %cst_23 : f32 to vector<32x32xf32>
    %41 = arith.select %39, %31, %40 : vector<32x32xi1>, vector<32x32xf32>
    %cst_24 = arith.constant 0.000000e+00 : f32
    %42 = vector.broadcast %cst_24 : f32 to vector<2x32xf32>
    %43 = vector.extract_strided_slice %41 {offsets = [0, 0], sizes = [30, 32], strides = [1, 1]} : vector<32x32xf32> to vector<30x32xf32>
    %44 = tpu.concatenate %42, %43 in 0 : vector<2x32xf32>, vector<30x32xf32> -> vector<32x32xf32>
    %cst_25 = arith.constant 0.000000e+00 : f32
    %45 = vector.broadcast %cst_25 : f32 to vector<2x32xf32>
    %46 = vector.extract_strided_slice %41 {offsets = [2, 0], sizes = [30, 32], strides = [1, 1]} : vector<32x32xf32> to vector<30x32xf32>
    %47 = tpu.concatenate %46, %45 in 0 : vector<30x32xf32>, vector<2x32xf32> -> vector<32x32xf32>
    %48 = tpu.concatenate %44, %41, %47 in 1 : vector<32x32xf32>, vector<32x32xf32>, vector<32x32xf32> -> vector<32x96xf32>
    %c0_26 = arith.constant 0 : index
    %c0_27 = arith.constant 0 : index
    %49 = vector.load %arg4[%c0_26, %c0_27] : memref<96x64xf32, #tpu.memory_space<vmem>>, vector<96x64xf32>
    %cst_28 = arith.constant dense<0.000000e+00> : vector<32x64xf32>
    %50 = tpu.matmul %48, %49, %cst_28 {dimension_numbers = #tpu.dot_dimension_numbers<[1], [0], [0], [1], [0, 0, 1, 1], [], []>} : vector<32x96xf32>, vector<96x64xf32>, vector<32x64xf32> -> vector<32x64xf32>
    %c0_29 = arith.constant 0 : index
    %c0_30 = arith.constant 0 : index
    %51 = vector.load %arg5[%c0_29, %c0_30] : memref<1x64xf32, #tpu.memory_space<vmem>>, vector<1x64xf32>
    %52 = vector.broadcast %51 : vector<1x64xf32> to vector<32x64xf32>
    %53 = arith.addf %50, %52 : vector<32x64xf32>
    %cst_31 = arith.constant 0.000000e+00 : f32
    %54 = vector.broadcast %cst_31 : f32 to vector<32x64xf32>
    %55 = arith.maximumf %53, %54 : vector<32x64xf32>
    %cst_32 = arith.constant 0.000000e+00 : f32
    %56 = vector.broadcast %cst_32 : f32 to vector<2x64xf32>
    %57 = vector.extract_strided_slice %55 {offsets = [2, 0], sizes = [30, 64], strides = [1, 1]} : vector<32x64xf32> to vector<30x64xf32>
    %58 = tpu.concatenate %57, %56 in 0 : vector<30x64xf32>, vector<2x64xf32> -> vector<32x64xf32>
    %59 = arith.maximumf %55, %58 : vector<32x64xf32>
    %c0_33 = arith.constant 0 : index
    %c0_34 = arith.constant 0 : index
    %60 = vector.load %arg6[%c0_33, %c0_34] : memref<64x128xf32, #tpu.memory_space<vmem>>, vector<64x128xf32>
    %cst_35 = arith.constant dense<0.000000e+00> : vector<32x128xf32>
    %61 = tpu.matmul %59, %60, %cst_35 {dimension_numbers = #tpu.dot_dimension_numbers<[1], [0], [0], [1], [0, 0, 1, 1], [], []>} : vector<32x64xf32>, vector<64x128xf32>, vector<32x128xf32> -> vector<32x128xf32>
    %c0_36 = arith.constant 0 : index
    %c0_37 = arith.constant 0 : index
    %62 = vector.load %arg8[%c0_36, %c0_37] : memref<1x128xf32, #tpu.memory_space<vmem>>, vector<1x128xf32>
    %63 = vector.broadcast %62 : vector<1x128xf32> to vector<32x128xf32>
    %64 = arith.addf %61, %63 : vector<32x128xf32>
    %c0_38 = arith.constant 0 : index
    %c0_39 = arith.constant 0 : index
    %65 = vector.load %arg7[%c0_38, %c0_39] : memref<32x128xf32, #tpu.memory_space<vmem>>, vector<32x128xf32>
    %66 = tpu.iota {dimensions = array<i32: 1>} : vector<1x128xi32>
    %c64_i32 = arith.constant 64 : i32
    %67 = vector.broadcast %c64_i32 : i32 to vector<1x128xi32>
    %68 = arith.cmpi sge, %66, %67 : vector<1x128xi32>
    %c96_i32 = arith.constant 96 : i32
    %69 = vector.broadcast %c96_i32 : i32 to vector<1x128xi32>
    %70 = arith.cmpi slt, %66, %69 : vector<1x128xi32>
    %71 = arith.andi %68, %70 : vector<1x128xi1>
    %cst_40 = arith.constant 0.000000e+00 : f32
    %72 = vector.broadcast %cst_40 : f32 to vector<1x32xf32>
    %cst_41 = arith.constant 0.000000e+00 : f32
    %73 = vector.broadcast %cst_41 : f32 to vector<1x32xf32>
    %74 = vector.extract_strided_slice %64 {offsets = [8, 0], sizes = [1, 128], strides = [1, 1]} : vector<32x128xf32> to vector<1x128xf32>
    %cst_42 = arith.constant dense<0.000000e+00> : vector<1x128xf32>
    %75 = tpu.matmul %72, %65, %cst_42 {dimension_numbers = #tpu.dot_dimension_numbers<[1], [0], [0], [1], [0, 0, 1, 1], [], []>} : vector<1x32xf32>, vector<32x128xf32>, vector<1x128xf32> -> vector<1x128xf32>
    %76 = arith.addf %74, %75 : vector<1x128xf32>
    %77 = math.tanh %76 : vector<1x128xf32>
    %78 = arith.negf %76 : vector<1x128xf32>
    %79 = math.exp %78 : vector<1x128xf32>
    %cst_43 = arith.constant 1.000000e+00 : f32
    %80 = vector.broadcast %cst_43 : f32 to vector<1x128xf32>
    %81 = arith.addf %80, %79 : vector<1x128xf32>
    %82 = arith.divf %80, %81 : vector<1x128xf32>
    %83 = arith.select %71, %77, %82 : vector<1x128xi1>, vector<1x128xf32>
    %84 = vector.extract_strided_slice %83 {offsets = [0, 0], sizes = [1, 32], strides = [1, 1]} : vector<1x128xf32> to vector<1x32xf32>
    %85 = vector.extract_strided_slice %83 {offsets = [0, 32], sizes = [1, 32], strides = [1, 1]} : vector<1x128xf32> to vector<1x32xf32>
    %86 = vector.extract_strided_slice %83 {offsets = [0, 64], sizes = [1, 32], strides = [1, 1]} : vector<1x128xf32> to vector<1x32xf32>
    %87 = vector.extract_strided_slice %83 {offsets = [0, 96], sizes = [1, 32], strides = [1, 1]} : vector<1x128xf32> to vector<1x32xf32>
    %88 = arith.mulf %85, %73 : vector<1x32xf32>
    %89 = arith.mulf %84, %86 : vector<1x32xf32>
    %90 = arith.addf %88, %89 : vector<1x32xf32>
    %91 = math.tanh %90 : vector<1x32xf32>
    %92 = arith.mulf %87, %91 : vector<1x32xf32>
    %93 = vector.extract_strided_slice %64 {offsets = [12, 0], sizes = [1, 128], strides = [1, 1]} : vector<32x128xf32> to vector<1x128xf32>
    %cst_44 = arith.constant dense<0.000000e+00> : vector<1x128xf32>
    %94 = tpu.matmul %92, %65, %cst_44 {dimension_numbers = #tpu.dot_dimension_numbers<[1], [0], [0], [1], [0, 0, 1, 1], [], []>} : vector<1x32xf32>, vector<32x128xf32>, vector<1x128xf32> -> vector<1x128xf32>
    %95 = arith.addf %93, %94 : vector<1x128xf32>
    %96 = math.tanh %95 : vector<1x128xf32>
    %97 = arith.negf %95 : vector<1x128xf32>
    %98 = math.exp %97 : vector<1x128xf32>
    %cst_45 = arith.constant 1.000000e+00 : f32
    %99 = vector.broadcast %cst_45 : f32 to vector<1x128xf32>
    %100 = arith.addf %99, %98 : vector<1x128xf32>
    %101 = arith.divf %99, %100 : vector<1x128xf32>
    %102 = arith.select %71, %96, %101 : vector<1x128xi1>, vector<1x128xf32>
    %103 = vector.extract_strided_slice %102 {offsets = [0, 0], sizes = [1, 32], strides = [1, 1]} : vector<1x128xf32> to vector<1x32xf32>
    %104 = vector.extract_strided_slice %102 {offsets = [0, 32], sizes = [1, 32], strides = [1, 1]} : vector<1x128xf32> to vector<1x32xf32>
    %105 = vector.extract_strided_slice %102 {offsets = [0, 64], sizes = [1, 32], strides = [1, 1]} : vector<1x128xf32> to vector<1x32xf32>
    %106 = vector.extract_strided_slice %102 {offsets = [0, 96], sizes = [1, 32], strides = [1, 1]} : vector<1x128xf32> to vector<1x32xf32>
    %107 = arith.mulf %104, %90 : vector<1x32xf32>
    %108 = arith.mulf %103, %105 : vector<1x32xf32>
    %109 = arith.addf %107, %108 : vector<1x32xf32>
    %110 = math.tanh %109 : vector<1x32xf32>
    %111 = arith.mulf %106, %110 : vector<1x32xf32>
    %112 = vector.extract_strided_slice %64 {offsets = [16, 0], sizes = [1, 128], strides = [1, 1]} : vector<32x128xf32> to vector<1x128xf32>
    %cst_46 = arith.constant dense<0.000000e+00> : vector<1x128xf32>
    %113 = tpu.matmul %111, %65, %cst_46 {dimension_numbers = #tpu.dot_dimension_numbers<[1], [0], [0], [1], [0, 0, 1, 1], [], []>} : vector<1x32xf32>, vector<32x128xf32>, vector<1x128xf32> -> vector<1x128xf32>
    %114 = arith.addf %112, %113 : vector<1x128xf32>
    %115 = math.tanh %114 : vector<1x128xf32>
    %116 = arith.negf %114 : vector<1x128xf32>
    %117 = math.exp %116 : vector<1x128xf32>
    %cst_47 = arith.constant 1.000000e+00 : f32
    %118 = vector.broadcast %cst_47 : f32 to vector<1x128xf32>
    %119 = arith.addf %118, %117 : vector<1x128xf32>
    %120 = arith.divf %118, %119 : vector<1x128xf32>
    %121 = arith.select %71, %115, %120 : vector<1x128xi1>, vector<1x128xf32>
    %122 = vector.extract_strided_slice %121 {offsets = [0, 0], sizes = [1, 32], strides = [1, 1]} : vector<1x128xf32> to vector<1x32xf32>
    %123 = vector.extract_strided_slice %121 {offsets = [0, 32], sizes = [1, 32], strides = [1, 1]} : vector<1x128xf32> to vector<1x32xf32>
    %124 = vector.extract_strided_slice %121 {offsets = [0, 64], sizes = [1, 32], strides = [1, 1]} : vector<1x128xf32> to vector<1x32xf32>
    %125 = vector.extract_strided_slice %121 {offsets = [0, 96], sizes = [1, 32], strides = [1, 1]} : vector<1x128xf32> to vector<1x32xf32>
    %126 = arith.mulf %123, %109 : vector<1x32xf32>
    %127 = arith.mulf %122, %124 : vector<1x32xf32>
    %128 = arith.addf %126, %127 : vector<1x32xf32>
    %129 = math.tanh %128 : vector<1x32xf32>
    %130 = arith.mulf %125, %129 : vector<1x32xf32>
    %131 = vector.extract_strided_slice %64 {offsets = [20, 0], sizes = [1, 128], strides = [1, 1]} : vector<32x128xf32> to vector<1x128xf32>
    %cst_48 = arith.constant dense<0.000000e+00> : vector<1x128xf32>
    %132 = tpu.matmul %130, %65, %cst_48 {dimension_numbers = #tpu.dot_dimension_numbers<[1], [0], [0], [1], [0, 0, 1, 1], [], []>} : vector<1x32xf32>, vector<32x128xf32>, vector<1x128xf32> -> vector<1x128xf32>
    %133 = arith.addf %131, %132 : vector<1x128xf32>
    %134 = math.tanh %133 : vector<1x128xf32>
    %135 = arith.negf %133 : vector<1x128xf32>
    %136 = math.exp %135 : vector<1x128xf32>
    %cst_49 = arith.constant 1.000000e+00 : f32
    %137 = vector.broadcast %cst_49 : f32 to vector<1x128xf32>
    %138 = arith.addf %137, %136 : vector<1x128xf32>
    %139 = arith.divf %137, %138 : vector<1x128xf32>
    %140 = arith.select %71, %134, %139 : vector<1x128xi1>, vector<1x128xf32>
    %141 = vector.extract_strided_slice %140 {offsets = [0, 0], sizes = [1, 32], strides = [1, 1]} : vector<1x128xf32> to vector<1x32xf32>
    %142 = vector.extract_strided_slice %140 {offsets = [0, 32], sizes = [1, 32], strides = [1, 1]} : vector<1x128xf32> to vector<1x32xf32>
    %143 = vector.extract_strided_slice %140 {offsets = [0, 64], sizes = [1, 32], strides = [1, 1]} : vector<1x128xf32> to vector<1x32xf32>
    %144 = vector.extract_strided_slice %140 {offsets = [0, 96], sizes = [1, 32], strides = [1, 1]} : vector<1x128xf32> to vector<1x32xf32>
    %145 = arith.mulf %142, %128 : vector<1x32xf32>
    %146 = arith.mulf %141, %143 : vector<1x32xf32>
    %147 = arith.addf %145, %146 : vector<1x32xf32>
    %148 = math.tanh %147 : vector<1x32xf32>
    %149 = arith.mulf %144, %148 : vector<1x32xf32>
    %c0_50 = arith.constant 0 : index
    %c0_51 = arith.constant 0 : index
    %150 = vector.load %arg9[%c0_50, %c0_51] : memref<1x32xf32, #tpu.memory_space<vmem>>, vector<1x32xf32>
    %151 = arith.mulf %149, %150 : vector<1x32xf32>
    %cst_52 = arith.constant dense<0.000000e+00> : vector<1xf32>
    %152 = vector.multi_reduction <add>, %151, %cst_52 [1] : vector<1x32xf32> to vector<1xf32>
    %153 = vector.shape_cast %152 : vector<1xf32> to vector<1x1xf32>
    %c0_53 = arith.constant 0 : index
    %c0_54 = arith.constant 0 : index
    %154 = vector.load %arg10[%c0_53, %c0_54] : memref<1x1xf32, #tpu.memory_space<vmem>>, vector<1x1xf32>
    %155 = arith.addf %153, %154 : vector<1x1xf32>
    %c0_55 = arith.constant 0 : index
    %c0_56 = arith.constant 0 : index
    %c0_57 = arith.constant 0 : index
    %156 = vector.load %arg11[%c0_55, %c0_56, %c0_57] : memref<1x1x1xf32, #tpu.memory_space<vmem>>, vector<1x1x1xf32>
    %157 = vector.shape_cast %156 : vector<1x1x1xf32> to vector<1x1xf32>
    %158 = vector.shape_cast %155 : vector<1x1xf32> to vector<1x1x1xf32>
    tpu.vector_store %arg11[%c0_55, %c0_56, %c0_57], %158 {strides = array<i32>} : memref<1x1x1xf32, #tpu.memory_space<vmem>>, vector<1x1x1xf32>,
    return
  }
  func.func @transform_0(%arg0: i32) -> (i32, i32, i32) {
    %c0_i32 = arith.constant 0 : i32
    %c0_i32_0 = arith.constant 0 : i32
    %c0_i32_1 = arith.constant 0 : i32
    return %arg0, %c0_i32, %c0_i32_0 : i32, i32, i32
  }
  func.func @transform_1(%arg0: i32) -> (i32, i32, i32) {
    %c0_i32 = arith.constant 0 : i32
    %c0_i32_0 = arith.constant 0 : i32
    %c0_i32_1 = arith.constant 0 : i32
    %c0_i32_2 = arith.constant 0 : i32
    return %c0_i32, %c0_i32_0, %c0_i32_1 : i32, i32, i32
  }
  func.func @transform_2(%arg0: i32) -> (i32, i32) {
    %c0_i32 = arith.constant 0 : i32
    %c0_i32_0 = arith.constant 0 : i32
    %c0_i32_1 = arith.constant 0 : i32
    return %c0_i32, %c0_i32_0 : i32, i32
  }
  func.func @transform_3(%arg0: i32) -> (i32, i32) {
    %c0_i32 = arith.constant 0 : i32
    %c0_i32_0 = arith.constant 0 : i32
    %c0_i32_1 = arith.constant 0 : i32
    return %c0_i32, %c0_i32_0 : i32, i32
  }
  func.func @transform_4(%arg0: i32) -> (i32, i32) {
    %c0_i32 = arith.constant 0 : i32
    %c0_i32_0 = arith.constant 0 : i32
    %c0_i32_1 = arith.constant 0 : i32
    return %c0_i32, %c0_i32_0 : i32, i32
  }
  func.func @transform_5(%arg0: i32) -> (i32, i32) {
    %c0_i32 = arith.constant 0 : i32
    %c0_i32_0 = arith.constant 0 : i32
    %c0_i32_1 = arith.constant 0 : i32
    return %c0_i32, %c0_i32_0 : i32, i32
  }
  func.func @transform_6(%arg0: i32) -> (i32, i32) {
    %c0_i32 = arith.constant 0 : i32
    %c0_i32_0 = arith.constant 0 : i32
    %c0_i32_1 = arith.constant 0 : i32
    return %c0_i32, %c0_i32_0 : i32, i32
  }
  func.func @transform_7(%arg0: i32) -> (i32, i32) {
    %c0_i32 = arith.constant 0 : i32
    %c0_i32_0 = arith.constant 0 : i32
    %c0_i32_1 = arith.constant 0 : i32
    return %c0_i32, %c0_i32_0 : i32, i32
  }
  func.func @transform_8(%arg0: i32) -> (i32, i32) {
    %c0_i32 = arith.constant 0 : i32
    %c0_i32_0 = arith.constant 0 : i32
    %c0_i32_1 = arith.constant 0 : i32
    return %c0_i32, %c0_i32_0 : i32, i32
  }
  func.func @transform_9(%arg0: i32) -> (i32, i32) {
    %c0_i32 = arith.constant 0 : i32
    %c0_i32_0 = arith.constant 0 : i32
    %c0_i32_1 = arith.constant 0 : i32
    return %c0_i32, %c0_i32_0 : i32, i32
  }
  func.func @transform_10(%arg0: i32) -> (i32, i32, i32) {
    %c0_i32 = arith.constant 0 : i32
    %c0_i32_0 = arith.constant 0 : i32
    %c0_i32_1 = arith.constant 0 : i32
    return %arg0, %c0_i32, %c0_i32_0 : i32, i32, i32
  }
}

</mosaic_0001>

<llo_original>
// kernel: tpu_custom_call.1
$region0: #{tpu_custom_call.1}
  #allocation0 [shape = 'u32[]', space=smem, size = 0x4, offset = 0x4, fixed_abs, tag = 'smem constant byte address 0x4 - core index']
  #allocation1 [shape = 'u32[72,128]{1,0:T(1,128)}', space=vmem, size = 0x9000, scoped, tag = 'internal scratch']
  #allocation2 [shape = 'f32[32,4]{1,0:T(8,128)}', space=vmem, size = 0x4000, scoped, tag = 'scratch operand']
  #allocation3 [shape = 'f32[1,1]{1,0:T(1,128)S(1)}', space=vmem, size = 0x200, scoped, tag = 'scoped memory for tpu_custom_call.1']
  %s0 = inlined_call_operand.vmem [shape: f32[2,16,4], index: 0, kind: input, shape index: {}]
  %s1 = inlined_call_operand.vmem [shape: f32[3,4,32], index: 1, kind: input, shape index: {}]
  %s2 = inlined_call_operand.vmem [shape: f32[1,32], index: 2, kind: input, shape index: {}]
  %s3 = inlined_call_operand.vmem [shape: f32[96,64], index: 3, kind: input, shape index: {}]
  %s4 = inlined_call_operand.vmem [shape: f32[1,64], index: 4, kind: input, shape index: {}]
  %s5 = inlined_call_operand.vmem [shape: f32[64,128], index: 5, kind: input, shape index: {}]
  %s6 = inlined_call_operand.vmem [shape: f32[32,128], index: 6, kind: input, shape index: {}]
  %s7 = inlined_call_operand.vmem [shape: f32[1,128], index: 7, kind: input, shape index: {}]
  %s8 = inlined_call_operand.vmem [shape: f32[1,32], index: 8, kind: input, shape index: {}]
  %s9 = inlined_call_operand.<no memory space> [shape: f32[1,1], index: 9, kind: input, shape index: {}]
  %s10 = inlined_call_operand.vmem [shape: f32[2,1,1], index: 10, kind: output, shape index: {}]
  %s11 = sld [smem:[#allocation0]]
  $region73: #{tpu_custom_call.1} parent=0
    _
  %s13 = ssub.s32 1, %s11
  %s14 = scalar_select 0, %s13, %s11
  %v15 = vstv %s9
  %16 = vst [vmem:[#allocation3] sm:$0x1] %v15
  loop: start=0, step=1, limit=4
  $region2: #{tpu_custom_call.1} parent=0 // loop_pre_header
    _
  $region3: #{tpu_custom_call.1} parent=0 // loop_header
    %s18 = sphi 0, %s22
    %p19 = scmp.ge.s32.totalorder %s18, 4
    %s28 = sphi 0, %s30
    %s31 = sphi 0, %s28
    %s32 = sphi 0, %s31
    %s48 = sphi 0, %s32
    %s52 = sphi 0, %s52
    %s54 = sphi 0, %s52
    %s55 = sphi 0, %s54
    %s69 = sphi 0, %s55
    %s73 = sphi 0, %s73
    %s75 = sphi 0, %s73
    %s76 = sphi 0, %s75
    %s90 = sphi 0, %s76
    %s94 = sphi 0, %s94
    %s96 = sphi 0, %s94
    %s97 = sphi 0, %s96
    %s111 = sphi 0, %s97
    %s115 = sphi 0, %s115
    %s117 = sphi 0, %s115
    %s118 = sphi 0, %s117
    %s132 = sphi 0, %s118
    %s136 = sphi 0, %s136
    %s138 = sphi 0, %s136
    %s139 = sphi 0, %s138
    %s153 = sphi 0, %s139
    %s157 = sphi 0, %s157
    %s159 = sphi 0, %s157
    %s160 = sphi 0, %s159
    %s174 = sphi 0, %s160
    %s178 = sphi 0, %s178
    %s180 = sphi 0, %s178
    %s181 = sphi 0, %s180
    %s195 = sphi 0, %s181
    %s199 = sphi 0, %s199
    %s201 = sphi 0, %s199
    %s202 = sphi 0, %s201
    %s216 = sphi 0, %s202
    %s220 = sphi 0, %s220
    %s222 = sphi 0, %s220
    %s223 = sphi 0, %s222
    %s237 = sphi 0, %s223
    %s243 = sphi 0, %s245
    %s246 = sphi 0, %s243
    %s247 = sphi 0, %s246
    %s263 = sphi 0, %s247
  $region4: #{tpu_custom_call.1} parent=0 // loop_header_branch
    %21 = sbr.rel (%p19) target = $region8
  $region5: #{tpu_custom_call.1} parent=0 // loop_body
    %s23 = ssub.s32 %s18, 1
    %s24 = ssub.s32 %s18, 2
    %s25 = sadd.s32 %s18, 1
    %s26 = ssub.s32 %s18, %s25
    %p27 = scmp.eq.s32.totalorder %s26, 0
    %s29 = sadd.s32 %s28, 1
    %s30 = scalar_select %p27, %s28, %s29
    %p33 = pneg %p27
    %p34 = scmp.eq.s32.totalorder %s18, 1
    %p35 = por %p33, %p34
    %p36 = scmp.ne.s32.totalorder %s28, %s31
    %p37 = scmp.eq.s32.totalorder %s18, 0
    %p38 = por %p36, %p37
    %p39 = scmp.ne.s32.totalorder %s28, %s31
    %p40 = scmp.eq.s32.totalorder %s23, 1
    %p41 = por %p39, %p40
    %p42 = scmp.ne.s32.totalorder %s31, %s32
    %p43 = scmp.eq.s32.totalorder %s23, 0
    %p44 = por %p42, %p43
    %p45 = scmp.ne.s32.totalorder %s31, %s32
    %p46 = scmp.eq.s32.totalorder %s24, 1
    %p47 = por %p45, %p46
    %p49 = scmp.ne.s32.totalorder %s32, %s48
    %p50 = scmp.eq.s32.totalorder %s24, 0
    %p51 = por %p49, %p50
    %s53 = sadd.s32 %s52, 1
    %p56 = scmp.eq.s32.totalorder %s18, 1
    %p57 = scmp.ne.s32.totalorder %s52, %s54
    %p58 = scmp.eq.s32.totalorder %s18, 0
    %p59 = por %p57, %p58
    %p60 = scmp.ne.s32.totalorder %s52, %s54
    %p61 = scmp.eq.s32.totalorder %s23, 1
    %p62 = por %p60, %p61
    %p63 = scmp.ne.s32.totalorder %s54, %s55
    %p64 = scmp.eq.s32.totalorder %s23, 0
    %p65 = por %p63, %p64
    %p66 = scmp.ne.s32.totalorder %s54, %s55
    %p67 = scmp.eq.s32.totalorder %s24, 1
    %p68 = por %p66, %p67
    %p70 = scmp.ne.s32.totalorder %s55, %s69
    %p71 = scmp.eq.s32.totalorder %s24, 0
    %p72 = por %p70, %p71
    %s74 = sadd.s32 %s73, 1
    %p77 = scmp.eq.s32.totalorder %s18, 1
    %p78 = scmp.ne.s32.totalorder %s73, %s75
    %p79 = scmp.eq.s32.totalorder %s18, 0
    %p80 = por %p78, %p79
    %p81 = scmp.ne.s32.totalorder %s73, %s75
    %p82 = scmp.eq.s32.totalorder %s23, 1
    %p83 = por %p81, %p82
    %p84 = scmp.ne.s32.totalorder %s75, %s76
    %p85 = scmp.eq.s32.totalorder %s23, 0
    %p86 = por %p84, %p85
    %p87 = scmp.ne.s32.totalorder %s75, %s76
    %p88 = scmp.eq.s32.totalorder %s24, 1
    %p89 = por %p87, %p88
    %p91 = scmp.ne.s32.totalorder %s76, %s90
    %p92 = scmp.eq.s32.totalorder %s24, 0
    %p93 = por %p91, %p92
    %s95 = sadd.s32 %s94, 1
    %p98 = scmp.eq.s32.totalorder %s18, 1
    %p99 = scmp.ne.s32.totalorder %s94, %s96
    %p100 = scmp.eq.s32.totalorder %s18, 0
    %p101 = por %p99, %p100
    %p102 = scmp.ne.s32.totalorder %s94, %s96
    %p103 = scmp.eq.s32.totalorder %s23, 1
    %p104 = por %p102, %p103
    %p105 = scmp.ne.s32.totalorder %s96, %s97
    %p106 = scmp.eq.s32.totalorder %s23, 0
    %p107 = por %p105, %p106
    %p108 = scmp.ne.s32.totalorder %s96, %s97
    %p109 = scmp.eq.s32.totalorder %s24, 1
    %p110 = por %p108, %p109
    %p112 = scmp.ne.s32.totalorder %s97, %s111
    %p113 = scmp.eq.s32.totalorder %s24, 0
    %p114 = por %p112, %p113
    %s116 = sadd.s32 %s115, 1
    %p119 = scmp.eq.s32.totalorder %s18, 1
    %p120 = scmp.ne.s32.totalorder %s115, %s117
    %p121 = scmp.eq.s32.totalorder %s18, 0
    %p122 = por %p120, %p121
    %p123 = scmp.ne.s32.totalorder %s115, %s117
    %p124 = scmp.eq.s32.totalorder %s23, 1
    %p125 = por %p123, %p124
    %p126 = scmp.ne.s32.totalorder %s117, %s118
    %p127 = scmp.eq.s32.totalorder %s23, 0
    %p128 = por %p126, %p127
    %p129 = scmp.ne.s32.totalorder %s117, %s118
    %p130 = scmp.eq.s32.totalorder %s24, 1
    %p131 = por %p129, %p130
    %p133 = scmp.ne.s32.totalorder %s118, %s132
    %p134 = scmp.eq.s32.totalorder %s24, 0
    %p135 = por %p133, %p134
    %s137 = sadd.s32 %s136, 1
    %p140 = scmp.eq.s32.totalorder %s18, 1
    %p141 = scmp.ne.s32.totalorder %s136, %s138
    %p142 = scmp.eq.s32.totalorder %s18, 0
    %p143 = por %p141, %p142
    %p144 = scmp.ne.s32.totalorder %s136, %s138
    %p145 = scmp.eq.s32.totalorder %s23, 1
    %p146 = por %p144, %p145
    %p147 = scmp.ne.s32.totalorder %s138, %s139
    %p148 = scmp.eq.s32.totalorder %s23, 0
    %p149 = por %p147, %p148
    %p150 = scmp.ne.s32.totalorder %s138, %s139
    %p151 = scmp.eq.s32.totalorder %s24, 1
    %p152 = por %p150, %p151
    %p154 = scmp.ne.s32.totalorder %s139, %s153
    %p155 = scmp.eq.s32.totalorder %s24, 0
    %p156 = por %p154, %p155
    %s158 = sadd.s32 %s157, 1
    %p161 = scmp.eq.s32.totalorder %s18, 1
    %p162 = scmp.ne.s32.totalorder %s157, %s159
    %p163 = scmp.eq.s32.totalorder %s18, 0
    %p164 = por %p162, %p163
    %p165 = scmp.ne.s32.totalorder %s157, %s159
    %p166 = scmp.eq.s32.totalorder %s23, 1
    %p167 = por %p165, %p166
    %p168 = scmp.ne.s32.totalorder %s159, %s160
    %p169 = scmp.eq.s32.totalorder %s23, 0
    %p170 = por %p168, %p169
    %p171 = scmp.ne.s32.totalorder %s159, %s160
    %p172 = scmp.eq.s32.totalorder %s24, 1
    %p173 = por %p171, %p172
    %p175 = scmp.ne.s32.totalorder %s160, %s174
    %p176 = scmp.eq.s32.totalorder %s24, 0
    %p177 = por %p175, %p176
    %s179 = sadd.s32 %s178, 1
    %p182 = scmp.eq.s32.totalorder %s18, 1
    %p183 = scmp.ne.s32.totalorder %s178, %s180
    %p184 = scmp.eq.s32.totalorder %s18, 0
    %p185 = por %p183, %p184
    %p186 = scmp.ne.s32.totalorder %s178, %s180
    %p187 = scmp.eq.s32.totalorder %s23, 1
    %p188 = por %p186, %p187
    %p189 = scmp.ne.s32.totalorder %s180, %s181
    %p190 = scmp.eq.s32.totalorder %s23, 0
    %p191 = por %p189, %p190
    %p192 = scmp.ne.s32.totalorder %s180, %s181
    %p193 = scmp.eq.s32.totalorder %s24, 1
    %p194 = por %p192, %p193
    %p196 = scmp.ne.s32.totalorder %s181, %s195
    %p197 = scmp.eq.s32.totalorder %s24, 0
    %p198 = por %p196, %p197
    %s200 = sadd.s32 %s199, 1
    %p203 = scmp.eq.s32.totalorder %s18, 1
    %p204 = scmp.ne.s32.totalorder %s199, %s201
    %p205 = scmp.eq.s32.totalorder %s18, 0
    %p206 = por %p204, %p205
    %p207 = scmp.ne.s32.totalorder %s199, %s201
    %p208 = scmp.eq.s32.totalorder %s23, 1
    %p209 = por %p207, %p208
    %p210 = scmp.ne.s32.totalorder %s201, %s202
    %p211 = scmp.eq.s32.totalorder %s23, 0
    %p212 = por %p210, %p211
    %p213 = scmp.ne.s32.totalorder %s201, %s202
    %p214 = scmp.eq.s32.totalorder %s24, 1
    %p215 = por %p213, %p214
    %p217 = scmp.ne.s32.totalorder %s202, %s216
    %p218 = scmp.eq.s32.totalorder %s24, 0
    %p219 = por %p217, %p218
    %s221 = sadd.s32 %s220, 1
    %p224 = scmp.eq.s32.totalorder %s18, 1
    %p225 = scmp.ne.s32.totalorder %s220, %s222
    %p226 = scmp.eq.s32.totalorder %s18, 0
    %p227 = por %p225, %p226
    %p228 = scmp.ne.s32.totalorder %s220, %s222
    %p229 = scmp.eq.s32.totalorder %s23, 1
    %p230 = por %p228, %p229
    %p231 = scmp.ne.s32.totalorder %s222, %s223
    %p232 = scmp.eq.s32.totalorder %s23, 0
    %p233 = por %p231, %p232
    %p234 = scmp.ne.s32.totalorder %s222, %s223
    %p235 = scmp.eq.s32.totalorder %s24, 1
    %p236 = por %p234, %p235
    %p238 = scmp.ne.s32.totalorder %s223, %s237
    %p239 = scmp.eq.s32.totalorder %s24, 0
    %p240 = por %p238, %p239
    %s241 = ssub.s32 %s18, %s25
    %p242 = scmp.eq.s32.totalorder %s241, 0
    %s244 = sadd.s32 %s243, 1
    %s245 = scalar_select %p242, %s243, %s244
    %p248 = pneg %p242
    %p249 = scmp.eq.s32.totalorder %s18, 1
    %p250 = por %p248, %p249
    %p251 = scmp.ne.s32.totalorder %s243, %s246
    %p252 = scmp.eq.s32.totalorder %s18, 0
    %p253 = por %p251, %p252
    %p254 = scmp.ne.s32.totalorder %s243, %s246
    %p255 = scmp.eq.s32.totalorder %s23, 1
    %p256 = por %p254, %p255
    %p257 = scmp.ne.s32.totalorder %s246, %s247
    %p258 = scmp.eq.s32.totalorder %s23, 0
    %p259 = por %p257, %p258
    %p260 = scmp.ne.s32.totalorder %s246, %s247
    %p261 = scmp.eq.s32.totalorder %s24, 1
    %p262 = por %p260, %p261
    %p264 = scmp.ne.s32.totalorder %s247, %s263
    %p265 = scmp.eq.s32.totalorder %s24, 0
    %p266 = por %p264, %p265
    %p267 = scmp.le.s32.totalorder 1, %s18
    %p268 = scmp.lt.s32.totalorder %s18, 3
    %p269 = pnand %p267, %p268
    %p270 = pneg %p269
    // Predicated region
    $region9: #{tpu_custom_call.1} parent=5 // pred_check
      _
    $region10: #{tpu_custom_call.1} parent=5 // pred_check_branch
      %272 = sbr.rel (%p269) target = $region12
    $region11: #{tpu_custom_call.1} parent=5 // pred_region
      %s273 = ssub.s32 %s18, 1
      // Predicated region
      $region13: #{tpu_custom_call.1} parent=11 // pred_check
        %p274 = pneg %p65
      $region14: #{tpu_custom_call.1} parent=11 // pred_check_branch
        %276 = sbr.rel (%p274) target = $region16
      $region15: #{tpu_custom_call.1} parent=11 // pred_region
        _
      $region16: #{tpu_custom_call.1} parent=11 // pred_fallthru
        _
      // Predicated region
      $region17: #{tpu_custom_call.1} parent=11 // pred_check
        %p277 = pneg %p86
      $region18: #{tpu_custom_call.1} parent=11 // pred_check_branch
        %279 = sbr.rel (%p277) target = $region20
      $region19: #{tpu_custom_call.1} parent=11 // pred_region
        _
      $region20: #{tpu_custom_call.1} parent=11 // pred_fallthru
        _
      // Predicated region
      $region21: #{tpu_custom_call.1} parent=11 // pred_check
        %p280 = pneg %p107
      $region22: #{tpu_custom_call.1} parent=11 // pred_check_branch
        %282 = sbr.rel (%p280) target = $region24
      $region23: #{tpu_custom_call.1} parent=11 // pred_region
        _
      $region24: #{tpu_custom_call.1} parent=11 // pred_fallthru
        _
      // Predicated region
      $region25: #{tpu_custom_call.1} parent=11 // pred_check
        %p283 = pneg %p128
      $region26: #{tpu_custom_call.1} parent=11 // pred_check_branch
        %285 = sbr.rel (%p283) target = $region28
      $region27: #{tpu_custom_call.1} parent=11 // pred_region
        _
      $region28: #{tpu_custom_call.1} parent=11 // pred_fallthru
        _
      // Predicated region
      $region29: #{tpu_custom_call.1} parent=11 // pred_check
        %p286 = pneg %p149
      $region30: #{tpu_custom_call.1} parent=11 // pred_check_branch
        %288 = sbr.rel (%p286) target = $region32
      $region31: #{tpu_custom_call.1} parent=11 // pred_region
        _
      $region32: #{tpu_custom_call.1} parent=11 // pred_fallthru
        _
      // Predicated region
      $region33: #{tpu_custom_call.1} parent=11 // pred_check
        %p289 = pneg %p170
      $region34: #{tpu_custom_call.1} parent=11 // pred_check_branch
        %291 = sbr.rel (%p289) target = $region36
      $region35: #{tpu_custom_call.1} parent=11 // pred_region
        _
      $region36: #{tpu_custom_call.1} parent=11 // pred_fallthru
        _
      // Predicated region
      $region37: #{tpu_custom_call.1} parent=11 // pred_check
        %p292 = pneg %p191
      $region38: #{tpu_custom_call.1} parent=11 // pred_check_branch
        %294 = sbr.rel (%p292) target = $region40
      $region39: #{tpu_custom_call.1} parent=11 // pred_region
        _
      $region40: #{tpu_custom_call.1} parent=11 // pred_fallthru
        _
      // Predicated region
      $region41: #{tpu_custom_call.1} parent=11 // pred_check
        %p295 = pneg %p212
      $region42: #{tpu_custom_call.1} parent=11 // pred_check_branch
        %297 = sbr.rel (%p295) target = $region44
      $region43: #{tpu_custom_call.1} parent=11 // pred_region
        _
      $region44: #{tpu_custom_call.1} parent=11 // pred_fallthru
        _
      // Predicated region
      $region45: #{tpu_custom_call.1} parent=11 // pred_check
        %p298 = pneg %p233
      $region46: #{tpu_custom_call.1} parent=11 // pred_check_branch
        %300 = sbr.rel (%p298) target = $region48
      $region47: #{tpu_custom_call.1} parent=11 // pred_region
        _
      $region48: #{tpu_custom_call.1} parent=11 // pred_fallthru
        _
    $region12: #{tpu_custom_call.1} parent=5 // pred_fallthru
      _
    %p301 = scmp.lt.s32.totalorder %s18, 2
    // Predicated region
    $region49: #{tpu_custom_call.1} parent=5 // pred_check
      %p302 = pneg %p301
    $region50: #{tpu_custom_call.1} parent=5 // pred_check_branch
      %304 = sbr.rel (%p302) target = $region52
    $region51: #{tpu_custom_call.1} parent=5 // pred_region
      // Predicated region
      $region53: #{tpu_custom_call.1} parent=51 // pred_check
        %p305 = pneg %p38
      $region54: #{tpu_custom_call.1} parent=51 // pred_check_branch
        %307 = sbr.rel (%p305) target = $region56
      $region55: #{tpu_custom_call.1} parent=51 // pred_region
        %p308 = scmp.lt.s32.totalorder %s18, 1
        %s309 = scalar_select %p308, %s18, 1
        %s310 = smul.addr %s309, 2
        %s311 = smul.addr %s310, 8
        %s312 = scalar_lea.vmem %s0, %s311
      $region56: #{tpu_custom_call.1} parent=51 // pred_fallthru
        _
    $region52: #{tpu_custom_call.1} parent=5 // pred_fallthru
      _
    %p313 = scmp.le.s32.totalorder 1, %s18
    %p314 = scmp.lt.s32.totalorder %s18, 3
    %p315 = pnand %p313, %p314
    %p316 = pneg %p315
    // Predicated region
    $region57: #{tpu_custom_call.1} parent=5 // pred_check
      _
    $region58: #{tpu_custom_call.1} parent=5 // pred_check_branch
      %318 = sbr.rel (%p315) target = $region60
    $region59: #{tpu_custom_call.1} parent=5 // pred_region
      %s319 = ssub.s32 %s18, 1
      %p320 = scmp.lt.s32.totalorder %s23, 1
      %s321 = scalar_select %p320, %s23, 1
      %s322 = smul.addr %s321, 2
      %s323 = smul.addr %s322, 8
      %s324 = scalar_lea.vmem %s0, %s323
      %p325 = pneg %p44
      %p326 = pneg %p41
      %p327 = pneg %p65
      %p328 = pneg %p62
      %p329 = pneg %p86
      %p330 = pneg %p83
      %p331 = pneg %p107
      %p332 = pneg %p104
      %p333 = pneg %p128
      %p334 = pneg %p125
      %p335 = pneg %p149
      %p336 = pneg %p146
      %p337 = pneg %p170
      %p338 = pneg %p167
      %p339 = pneg %p191
      %p340 = pneg %p188
      %p341 = pneg %p212
      %p342 = pneg %p209
      %p343 = pneg %p233
      %p344 = pneg %p230
      %p345 = pneg %p259
      %p346 = pneg %p256
      %p347 = scmp.lt.s32.totalorder %s23, 1
      %s348 = scalar_select %p347, %s23, 1
      %s349 = scalar_lea.vmem %s10, %s348
      %p350 = scmp.lt.s32.totalorder %s23, 1
      %s351 = scalar_select %p350, %s23, 1
      %s352 = smul.addr %s351, 2
      %s353 = smul.addr %s352, 8
      %s354 = scalar_lea.vmem %s0, %s353
      %p355 = scmp.lt.s32.totalorder %s23, 1
      %s356 = scalar_select %p355, %s23, 1
      %s357 = scalar_lea.vmem %s10, %s356
      %vm358 = vcmask 31744
      %359 = vst.msk [vmem:[#allocation2] sm:$0xff] %vm358, 0.0
      %360 = vst.msk [vmem:[#allocation2 + $0x8] sm:$0xff] %vm358, 0.0
      %361 = vst.msk [vmem:[#allocation2 + $0x10] sm:$0xff] %vm358, 0.0
      %362 = vst.msk [vmem:[#allocation2 + $0x18] sm:$0xff] %vm358, 0.0
      %v363 = vld [vmem:[%s354] sm:$0xff]
      %v364 = vld [vmem:[%s354 + $0x8] sm:$0xff]
      %365 = vst.msk [vmem:[#allocation2 + $0x8] sm:$0xff] %vm358, %v363
      %366 = vst.msk [vmem:[#allocation2 + $0x10] sm:$0xff] %vm358, %v364
      %v367 = vld [vmem:[#allocation2] sm:$0xff]
      %v368 = vld [vmem:[#allocation2 + $0x8] sm:$0xff]
      %v369 = vld [vmem:[#allocation2 + $0x10] sm:$0xff]
      %v370 = vld [vmem:[#allocation2 + $0x18] sm:$0xff]
      %vm375 = vcmask 1040384
      %v376 = vrot.slane %v367, 7
      %v377 = vrot.slane %v368, 7
      %v378 = vsel %vm375, %v376, %v377
      %v379 = vrot.slane %v369, 7
      %v380 = vsel %vm375, %v377, %v379
      %v381 = vrot.slane %v370, 7
      %v382 = vsel %vm375, %v379, %v381
      %v384 = vsel %vm375, 0.0, %v376
      %v385 = vld [vmem:[%s1] sm:$0xf]
      %s386 = scalar_lea.vmem %s1, 4
      %v387 = vld [vmem:[%s386] sm:$0xf]
      %v388 = vsel %vm358, %v367, 0
      %v390 = vsel %vm358, %v368, 0
      %v392 = vsel %vm358, %v369, 0
      %v394 = vsel %vm358, %v370, 0
      %vm396 = vcmask 1043456
      %v398 = vsel %vm396, %v387, 0
      %400 = vmatpush.msra.mxu0 0.0
      %401 = vmatpush.msra.mxu0 0.0
      %402 = vmatpush.msra.mxu0 0.0
      %403 = vmatpush.msra.mxu0 0.0
      %404 = vmatpush.msra.mxu0 0.0
      %405 = vmatpush.msra.mxu0 0.0
      %406 = vmatpush.msra.mxu0 0.0
      %407 = vmatpush.msra.mxu0 0.0
      %408 = vmatpush.msra.mxu0 0.0
      %409 = vmatpush.msra.mxu0 0.0
      %410 = vmatpush.msra.mxu0 0.0
      %411 = vmatpush.msra.mxu0 0.0
      %412 = vmatpush.msra.mxu0 0.0
      %413 = vmatpush.msra.mxu0 0.0
      %414 = vmatpush.msra.mxu0 0.0
      %415 = vmatpush.msra.mxu0 %v398
      %416 = vmatmul.f32.gmra.mxu0 %v388
      %v417 = vpop.f32.mrf.mxu0
      %v418 = vadd.f32 0.0, %v417
      %419 = vmatmul.f32.gmra.mxu0 %v390
      %v420 = vpop.f32.mrf.mxu0
      %v421 = vadd.f32 0.0, %v420
      %422 = vmatmul.f32.gmra.mxu0 %v392
      %v423 = vpop.f32.mrf.mxu0
      %v424 = vadd.f32 0.0, %v423
      %425 = vmatmul.f32.gmra.mxu0 %v394
      %v426 = vpop.f32.mrf.mxu0
      %v427 = vadd.f32 0.0, %v426
      %428 = vdwg.mxu0
      %v430 = vsel %vm358, %v384, 0
      %v432 = vsel %vm358, %v378, 0
      %v434 = vsel %vm358, %v380, 0
      %v436 = vsel %vm358, %v382, 0
      %v439 = vsel %vm396, %v385, 0
      %441 = vmatpush.msra.mxu0 0.0
      %442 = vmatpush.msra.mxu0 0.0
      %443 = vmatpush.msra.mxu0 0.0
      %444 = vmatpush.msra.mxu0 0.0
      %445 = vmatpush.msra.mxu0 0.0
      %446 = vmatpush.msra.mxu0 0.0
      %447 = vmatpush.msra.mxu0 0.0
      %448 = vmatpush.msra.mxu0 0.0
      %449 = vmatpush.msra.mxu0 0.0
      %450 = vmatpush.msra.mxu0 0.0
      %451 = vmatpush.msra.mxu0 0.0
      %452 = vmatpush.msra.mxu0 0.0
      %453 = vmatpush.msra.mxu0 0.0
      %454 = vmatpush.msra.mxu0 0.0
      %455 = vmatpush.msra.mxu0 0.0
      %456 = vmatpush.msra.mxu0 %v439
      %457 = vmatmul.f32.gmra.mxu0 %v430
      %v458 = vpop.f32.mrf.mxu0
      %v459 = vadd.f32 %v418, %v458
      %460 = vmatmul.f32.gmra.mxu0 %v432
      %v461 = vpop.f32.mrf.mxu0
      %v462 = vadd.f32 %v421, %v461
      %463 = vmatmul.f32.gmra.mxu0 %v434
      %v464 = vpop.f32.mrf.mxu0
      %v465 = vadd.f32 %v424, %v464
      %466 = vmatmul.f32.gmra.mxu0 %v436
      %v467 = vpop.f32.mrf.mxu0
      %v468 = vadd.f32 %v427, %v467
      %469 = vdwg.mxu0
      %vm470 = vcmask 1046528
      %v471 = vrot.slane %v367, 1
      %v472 = vrot.slane %v368, 1
      %v473 = vsel %vm470, %v471, %v472
      %v474 = vrot.slane %v369, 1
      %v475 = vsel %vm470, %v472, %v474
      %v476 = vrot.slane %v370, 1
      %v477 = vsel %vm470, %v474, %v476
      %v479 = vsel %vm470, %v476, 0.0
      %s480 = scalar_lea.vmem %s1, 8
      %v481 = vld [vmem:[%s480] sm:$0xf]
      %v482 = vsel %vm358, %v473, 0
      %v484 = vsel %vm358, %v475, 0
      %v486 = vsel %vm358, %v477, 0
      %v489 = vsel %vm358, %v479, 0
      %v492 = vsel %vm396, %v481, 0
      %494 = vmatpush.msra.mxu0 0.0
      %495 = vmatpush.msra.mxu0 0.0
      %496 = vmatpush.msra.mxu0 0.0
      %497 = vmatpush.msra.mxu0 0.0
      %498 = vmatpush.msra.mxu0 0.0
      %499 = vmatpush.msra.mxu0 0.0
      %500 = vmatpush.msra.mxu0 0.0
      %501 = vmatpush.msra.mxu0 0.0
      %502 = vmatpush.msra.mxu0 0.0
      %503 = vmatpush.msra.mxu0 0.0
      %504 = vmatpush.msra.mxu0 0.0
      %505 = vmatpush.msra.mxu0 0.0
      %506 = vmatpush.msra.mxu0 0.0
      %507 = vmatpush.msra.mxu0 0.0
      %508 = vmatpush.msra.mxu0 0.0
      %509 = vmatpush.msra.mxu0 %v492
      %510 = vmatmul.f32.gmra.mxu0 %v482
      %v511 = vpop.f32.mrf.mxu0
      %v512 = vadd.f32 0.0, %v511
      %513 = vmatmul.f32.gmra.mxu0 %v484
      %v514 = vpop.f32.mrf.mxu0
      %v515 = vadd.f32 0.0, %v514
      %516 = vmatmul.f32.gmra.mxu0 %v486
      %v517 = vpop.f32.mrf.mxu0
      %v518 = vadd.f32 0.0, %v517
      %519 = vmatmul.f32.gmra.mxu0 %v489
      %v520 = vpop.f32.mrf.mxu0
      %v521 = vadd.f32 0.0, %v520
      %522 = vdwg.mxu0
      %v523 = vadd.f32 %v459, %v512
      %v524 = vadd.f32 %v462, %v515
      %v525 = vadd.f32 %v465, %v518
      %v526 = vadd.f32 %v468, %v521
      %v527 = vld [vmem:[%s2] sm:$0x1]
      %v529 = vperm.slane %v527, 0
      %v531 = vadd.f32 %v523, %v529
      %v532 = vadd.f32 %v524, %v529
      %v533 = vadd.f32 %v525, %v529
      %v534 = vadd.f32 %v526, %v529
      %v535 = vmax.f32 %v531, 0.0
      %v536 = vmax.f32 %v532, 0.0
      %v537 = vmax.f32 %v533, 0.0
      %v538 = vmax.f32 %v534, 0.0
      %v543 = vrot.slane %v535, 1
      %v544 = vrot.slane %v536, 1
      %v545 = vsel %vm470, %v543, %v544
      %v546 = vrot.slane %v537, 1
      %v547 = vsel %vm470, %v544, %v546
      %v548 = vrot.slane %v538, 1
      %v549 = vsel %vm470, %v546, %v548
      %v554 = vsel %vm470, %v548, 0.0
      %v555 = vmax.f32 %v535, %v545
      %v556 = vmax.f32 %v536, %v547
      %v557 = vmax.f32 %v537, %v549
      %v558 = vmax.f32 %v538, %v554
      %v559 = vlaneseq
      %v560 = vshrl.u32 %v559, 7
      %v561 = vadd.s32 %v560, 8
      %v562 = vadd.s32 %v560, 16
      %v563 = vadd.s32 %v560, 24
      %vm564 = vcmp.ge.s32.totalorder %v560, 8
      %vm565 = vcmp.ge.s32.totalorder %v561, 8
      %vm566 = vcmp.ge.s32.totalorder %v562, 8
      %vm567 = vcmp.ge.s32.totalorder %v563, 8
      %vm568 = vcmp.lt.s32.totalorder %v560, 24
      %vm569 = vcmp.lt.s32.totalorder %v561, 24
      %vm570 = vcmp.lt.s32.totalorder %v562, 24
      %vm571 = vcmp.lt.s32.totalorder %v563, 24
      %vm572 = vmand %vm564, %vm568
      %vm573 = vmand %vm565, %vm569
      %vm574 = vmand %vm566, %vm570
      %vm575 = vmand %vm567, %vm571
      %v576 = vsel %vm572, 1, 0
      %v577 = vsel %vm573, 1, 0
      %v578 = vsel %vm574, 1, 0
      %v579 = vsel %vm575, 1, 0
      %vm580 = vcmp.eq.s32.totalorder %v576, 1
      %vm581 = vcmp.eq.s32.totalorder %v577, 1
      %vm582 = vcmp.eq.s32.totalorder %v578, 1
      %vm583 = vcmp.eq.s32.totalorder %v579, 1
      %v584 = vsel %vm580, %v555, 0.0
      %v585 = vsel %vm581, %v556, 0.0
      %v586 = vsel %vm582, %v557, 0.0
      %v587 = vsel %vm583, %v558, 0.0
      %vm592 = vcmask 1041408
      %v593 = vrot.slane %v584, 6
      %v594 = vrot.slane %v585, 6
      %v595 = vsel %vm592, %v593, %v594
      %v596 = vrot.slane %v586, 6
      %v597 = vsel %vm592, %v594, %v596
      %v598 = vrot.slane %v587, 6
      %v599 = vsel %vm592, %v596, %v598
      %v604 = vsel %vm592, 0.0, %v593
      %vm605 = vcmask 1045504
      %v606 = vrot.slane %v584, 2
      %v607 = vrot.slane %v585, 2
      %v608 = vsel %vm605, %v606, %v607
      %v609 = vrot.slane %v586, 2
      %v610 = vsel %vm605, %v607, %v609
      %v611 = vrot.slane %v587, 2
      %v612 = vsel %vm605, %v609, %v611
      %v614 = vsel %vm605, %v611, 0.0
      %615 = vrot.lane.b32.xlu0 %v584, 32
      %v616 = vpop.permute.xlu0 %615
      %617 = vrot.lane.b32.xlu0 %v585, 32
      %v618 = vpop.permute.xlu0 %617
      %619 = vrot.lane.b32.xlu0 %v586, 32
      %v620 = vpop.permute.xlu0 %619
      %621 = vrot.lane.b32.xlu0 %v587, 32
      %v622 = vpop.permute.xlu0 %621
      %628 = vrot.lane.b32.xlu0 %v608, 64
      %v629 = vpop.permute.xlu0 %628
      %630 = vrot.lane.b32.xlu0 %v610, 64
      %v631 = vpop.permute.xlu0 %630
      %632 = vrot.lane.b32.xlu0 %v612, 64
      %v633 = vpop.permute.xlu0 %632
      %634 = vrot.lane.b32.xlu0 %v614, 64
      %v635 = vpop.permute.xlu0 %634
      %vm640 = vcmask 261120
      %v641 = vsel %vm640, %v604, %v616
      %v642 = vsel %vm640, %v595, %v618
      %v643 = vsel %vm640, %v597, %v620
      %v644 = vsel %vm640, %v599, %v622
      %vm645 = vcmask 523264
      %v646 = vsel %vm645, %v641, %v629
      %v647 = vsel %vm645, %v642, %v631
      %v648 = vsel %vm645, %v643, %v633
      %v649 = vsel %vm645, %v644, %v635
      %v650 = vld [vmem:[%s3] sm:$0xff]
      %v651 = vld [vmem:[%s3 + $0x8] sm:$0xff]
      %v652 = vld [vmem:[%s3 + $0x10] sm:$0xff]
      %v653 = vld [vmem:[%s3 + $0x18] sm:$0xff]
      %v654 = vld [vmem:[%s3 + $0x20] sm:$0xff]
      %v655 = vld [vmem:[%s3 + $0x28] sm:$0xff]
      %v656 = vld [vmem:[%s3 + $0x30] sm:$0xff]
      %v657 = vld [vmem:[%s3 + $0x38] sm:$0xff]
      %v658 = vld [vmem:[%s3 + $0x40] sm:$0xff]
      %v659 = vld [vmem:[%s3 + $0x48] sm:$0xff]
      %v660 = vld [vmem:[%s3 + $0x50] sm:$0xff]
      %v661 = vld [vmem:[%s3 + $0x58] sm:$0xff]
      %v662 = vld [vmem:[%s4] sm:$0x1]
      %v664 = vperm.slane %v662, 0
      %vm666 = vcmask 785408
      %v668 = vsel %vm666, %v646, 0
      %v671 = vsel %vm666, %v647, 0
      %v674 = vsel %vm666, %v648, 0
      %v677 = vsel %vm666, %v649, 0
      %679 = vmatpush.msra.mxu0 0.0
      %680 = vmatpush.msra.mxu0 0.0
      %681 = vmatpush.msra.mxu0 0.0
      %682 = vmatpush.msra.mxu0 0.0
      %683 = vmatpush.msra.mxu0 %v661
      %684 = vmatpush.msra.mxu0 %v660
      %685 = vmatpush.msra.mxu0 %v659
      %686 = vmatpush.msra.mxu0 %v658
      %687 = vmatpush.msra.mxu0 %v657
      %688 = vmatpush.msra.mxu0 %v656
      %689 = vmatpush.msra.mxu0 %v655
      %690 = vmatpush.msra.mxu0 %v654
      %691 = vmatpush.msra.mxu0 %v653
      %692 = vmatpush.msra.mxu0 %v652
      %693 = vmatpush.msra.mxu0 %v651
      %694 = vmatpush.msra.mxu0 %v650
      %695 = vmatmul.f32.gmra.mxu0 %v668
      %v696 = vpop.f32.mrf.mxu0
      %v697 = vadd.f32 %v664, %v696
      %698 = vmatmul.f32.gmra.mxu0 %v671
      %v699 = vpop.f32.mrf.mxu0
      %v700 = vadd.f32 %v664, %v699
      %701 = vmatmul.f32.gmra.mxu0 %v674
      %v702 = vpop.f32.mrf.mxu0
      %v703 = vadd.f32 %v664, %v702
      %704 = vmatmul.f32.gmra.mxu0 %v677
      %v705 = vpop.f32.mrf.mxu0
      %v706 = vadd.f32 %v664, %v705
      %707 = vdwg.mxu0
      %v708 = vmax.f32 %v697, 0.0
      %v709 = vmax.f32 %v700, 0.0
      %v710 = vmax.f32 %v703, 0.0
      %v711 = vmax.f32 %v706, 0.0
      %v716 = vrot.slane %v708, 2
      %v717 = vrot.slane %v709, 2
      %v718 = vsel %vm605, %v716, %v717
      %v719 = vrot.slane %v710, 2
      %v720 = vsel %vm605, %v717, %v719
      %v721 = vrot.slane %v711, 2
      %v722 = vsel %vm605, %v719, %v721
      %v727 = vsel %vm605, %v721, 0.0
      %v728 = vmax.f32 %v708, %v718
      %v729 = vmax.f32 %v709, %v720
      %v730 = vmax.f32 %v710, %v722
      %v731 = vmax.f32 %v711, %v727
      %v732 = vld [vmem:[%s5] sm:$0xff]
      %v733 = vld [vmem:[%s5 + $0x8] sm:$0xff]
      %v734 = vld [vmem:[%s5 + $0x10] sm:$0xff]
      %v735 = vld [vmem:[%s5 + $0x18] sm:$0xff]
      %v736 = vld [vmem:[%s5 + $0x20] sm:$0xff]
      %v737 = vld [vmem:[%s5 + $0x28] sm:$0xff]
      %v738 = vld [vmem:[%s5 + $0x30] sm:$0xff]
      %v739 = vld [vmem:[%s5 + $0x38] sm:$0xff]
      %v740 = vld [vmem:[%s7] sm:$0x1]
      %v742 = vperm.slane %v740, 0
      %v745 = vsel %vm645, %v728, 0
      %v748 = vsel %vm645, %v729, 0
      %v751 = vsel %vm645, %v730, 0
      %v754 = vsel %vm645, %v731, 0
      %756 = vmatpush.msra.mxu0 0.0
      %757 = vmatpush.msra.mxu0 0.0
      %758 = vmatpush.msra.mxu0 0.0
      %759 = vmatpush.msra.mxu0 0.0
      %760 = vmatpush.msra.mxu0 0.0
      %761 = vmatpush.msra.mxu0 0.0
      %762 = vmatpush.msra.mxu0 0.0
      %763 = vmatpush.msra.mxu0 0.0
      %764 = vmatpush.msra.mxu0 %v739
      %765 = vmatpush.msra.mxu0 %v738
      %766 = vmatpush.msra.mxu0 %v737
      %767 = vmatpush.msra.mxu0 %v736
      %768 = vmatpush.msra.mxu0 %v735
      %769 = vmatpush.msra.mxu0 %v734
      %770 = vmatpush.msra.mxu0 %v733
      %771 = vmatpush.msra.mxu0 %v732
      %772 = vmatmul.f32.gmra.mxu0 %v745
      %v773 = vpop.f32.mrf.mxu0
      %774 = vmatmul.f32.gmra.mxu0 %v748
      %v775 = vpop.f32.mrf.mxu0
      %v776 = vadd.f32 %v742, %v775
      %777 = vmatmul.f32.gmra.mxu0 %v751
      %v778 = vpop.f32.mrf.mxu0
      %v779 = vadd.f32 %v742, %v778
      %780 = vmatmul.f32.gmra.mxu0 %v754
      %v781 = vpop.f32.mrf.mxu0
      %782 = vdwg.mxu0
      %v783 = vld [vmem:[%s6] sm:$0xff]
      %v784 = vld [vmem:[%s6 + $0x8] sm:$0xff]
      %v785 = vld [vmem:[%s6 + $0x10] sm:$0xff]
      %v786 = vld [vmem:[%s6 + $0x18] sm:$0xff]
      %v787 = vlaneseq
      %v788 = vand.u32 %v787, 127
      %vm789 = vcmp.ge.s32.totalorder %v788, 64
      %vm790 = vcmp.lt.s32.totalorder %v788, 96
      %vm791 = vmand %vm789, %vm790
      %v793 = vsel %vm640, 0.0, 0
      %795 = vmatpush.msra.mxu0 0.0
      %796 = vmatpush.msra.mxu0 0.0
      %797 = vmatpush.msra.mxu0 0.0
      %798 = vmatpush.msra.mxu0 0.0
      %799 = vmatpush.msra.mxu0 0.0
      %800 = vmatpush.msra.mxu0 0.0
      %801 = vmatpush.msra.mxu0 0.0
      %802 = vmatpush.msra.mxu0 0.0
      %803 = vmatpush.msra.mxu0 0.0
      %804 = vmatpush.msra.mxu0 0.0
      %805 = vmatpush.msra.mxu0 0.0
      %806 = vmatpush.msra.mxu0 0.0
      %807 = vmatpush.msra.mxu0 %v786
      %808 = vmatpush.msra.mxu0 %v785
      %809 = vmatpush.msra.mxu0 %v784
      %810 = vmatpush.msra.mxu0 %v783
      %811 = vmatmul.f32.gmra.mxu0 %v793
      %v812 = vpop.f32.mrf.mxu0
      %v813 = vadd.f32 0.0, %v812
      %814 = vdwg.mxu0
      %v815 = vadd.f32 %v776, %v813
      %v816 = vtanh.pop %v815
      %v817 = vxor.u32 %v815, 2147483648
      %v818 = vmul.f32 %v817, 1.442695
      %v819 = vpow.pop %v818
      %v820 = vadd.f32 %v819, 1.0
      %v821 = vrcp.pop %v820
      %v822 = vmul.f32 %v820, %v821
      %v823 = vsub.f32 1.0, %v822
      %v824 = vmul.f32 %v821, %v823
      %v825 = vadd.f32 %v821, %v824
      %vm826 = vweird.f32 %v820
      %vm827 = vweird.f32 %v821
      %vm828 = vmor %vm826, %vm827
      %v829 = vsel %vm828, %v821, %v825
      %v830 = vand.u32 2147483647, %v820
      %vm831 = vcmp.eq.f32.partialorder %v830, 8.507059e+37
      %v832 = vand.u32 %v820, 2147483648
      %v833 = vor.u32 1.1754944e-38, %v832
      %v834 = vsel %vm831, %v833, %v829
      %v835 = vmul.f32 1.0, %v834
      %v836 = vsel %vm791, %v816, %v835
      %v837 = vmul.f32 %v836, 0.0
      %839 = vrot.lane.b32.xlu0 %v836, 64
      %v840 = vpop.permute.xlu0 %839
      %v842 = vmul.f32 %v836, %v840
      %844 = vrot.lane.b32.xlu0 %v842, 32
      %v845 = vpop.permute.xlu0 %844
      %v847 = vadd.f32 %v837, %v845
      %v848 = vtanh.pop %v847
      %850 = vrot.lane.b32.xlu0 %v848, 64
      %v851 = vpop.permute.xlu0 %850
      %v853 = vmul.f32 %v836, %v851
      %855 = vrot.lane.b32.xlu0 %v853, 32
      %v856 = vpop.permute.xlu0 %855
      %v857 = vsel %vm640, %v856, 0
      %859 = vmatpush.msra.mxu0 0.0
      %860 = vmatpush.msra.mxu0 0.0
      %861 = vmatpush.msra.mxu0 0.0
      %862 = vmatpush.msra.mxu0 0.0
      %863 = vmatpush.msra.mxu0 0.0
      %864 = vmatpush.msra.mxu0 0.0
      %865 = vmatpush.msra.mxu0 0.0
      %866 = vmatpush.msra.mxu0 0.0
      %867 = vmatpush.msra.mxu0 0.0
      %868 = vmatpush.msra.mxu0 0.0
      %869 = vmatpush.msra.mxu0 0.0
      %870 = vmatpush.msra.mxu0 0.0
      %871 = vmatpush.msra.mxu0 %v786
      %872 = vmatpush.msra.mxu0 %v785
      %873 = vmatpush.msra.mxu0 %v784
      %874 = vmatpush.msra.mxu0 %v783
      %875 = vmatmul.f32.gmra.mxu0 %v857
      %v876 = vpop.f32.mrf.mxu0
      %v877 = vadd.f32 0.0, %v876
      %878 = vdwg.mxu0
      %v880 = vrot.slane %v877, 4
      %v882 = vadd.f32 %v776, %v880
      %v883 = vtanh.pop %v882
      %v884 = vxor.u32 %v882, 2147483648
      %v885 = vmul.f32 %v884, 1.442695
      %v886 = vpow.pop %v885
      %v887 = vadd.f32 %v886, 1.0
      %v888 = vrcp.pop %v887
      %v889 = vmul.f32 %v887, %v888
      %v890 = vsub.f32 1.0, %v889
      %v891 = vmul.f32 %v888, %v890
      %v892 = vadd.f32 %v888, %v891
      %vm893 = vweird.f32 %v887
      %vm894 = vweird.f32 %v888
      %vm895 = vmor %vm893, %vm894
      %v896 = vsel %vm895, %v888, %v892
      %v897 = vand.u32 2147483647, %v887
      %vm898 = vcmp.eq.f32.partialorder %v897, 8.507059e+37
      %v899 = vand.u32 %v887, 2147483648
      %v900 = vor.u32 1.1754944e-38, %v899
      %v901 = vsel %vm898, %v900, %v896
      %v902 = vmul.f32 1.0, %v901
      %v903 = vsel %vm791, %v883, %v902
      %v905 = vrot.slane %v847, 4
      %v907 = vmul.f32 %v903, %v905
      %909 = vrot.lane.b32.xlu0 %v903, 64
      %v910 = vpop.permute.xlu0 %909
      %v912 = vmul.f32 %v903, %v910
      %914 = vrot.lane.b32.xlu0 %v912, 32
      %v915 = vpop.permute.xlu0 %914
      %v917 = vadd.f32 %v907, %v915
      %v918 = vtanh.pop %v917
      %920 = vrot.lane.b32.xlu0 %v918, 64
      %v921 = vpop.permute.xlu0 %920
      %v923 = vmul.f32 %v903, %v921
      %v925 = vrot.slane %v923, 4
      %926 = vrot.lane.b32.xlu0 %v925, 32
      %v927 = vpop.permute.xlu0 %926
      %v928 = vsel %vm640, %v927, 0
      %930 = vmatpush.msra.mxu0 0.0
      %931 = vmatpush.msra.mxu0 0.0
      %932 = vmatpush.msra.mxu0 0.0
      %933 = vmatpush.msra.mxu0 0.0
      %934 = vmatpush.msra.mxu0 0.0
      %935 = vmatpush.msra.mxu0 0.0
      %936 = vmatpush.msra.mxu0 0.0
      %937 = vmatpush.msra.mxu0 0.0
      %938 = vmatpush.msra.mxu0 0.0
      %939 = vmatpush.msra.mxu0 0.0
      %940 = vmatpush.msra.mxu0 0.0
      %941 = vmatpush.msra.mxu0 0.0
      %942 = vmatpush.msra.mxu0 %v786
      %943 = vmatpush.msra.mxu0 %v785
      %944 = vmatpush.msra.mxu0 %v784
      %945 = vmatpush.msra.mxu0 %v783
      %946 = vmatmul.f32.gmra.mxu0 %v928
      %v947 = vpop.f32.mrf.mxu0
      %v948 = vadd.f32 0.0, %v947
      %949 = vdwg.mxu0
      %v950 = vadd.f32 %v779, %v948
      %v951 = vtanh.pop %v950
      %v952 = vxor.u32 %v950, 2147483648
      %v953 = vmul.f32 %v952, 1.442695
      %v954 = vpow.pop %v953
      %v955 = vadd.f32 %v954, 1.0
      %v956 = vrcp.pop %v955
      %v957 = vmul.f32 %v955, %v956
      %v958 = vsub.f32 1.0, %v957
      %v959 = vmul.f32 %v956, %v958
      %v960 = vadd.f32 %v956, %v959
      %vm961 = vweird.f32 %v955
      %vm962 = vweird.f32 %v956
      %vm963 = vmor %vm961, %vm962
      %v964 = vsel %vm963, %v956, %v960
      %v965 = vand.u32 2147483647, %v955
      %vm966 = vcmp.eq.f32.partialorder %v965, 8.507059e+37
      %v967 = vand.u32 %v955, 2147483648
      %v968 = vor.u32 1.1754944e-38, %v967
      %v969 = vsel %vm966, %v968, %v964
      %v970 = vmul.f32 1.0, %v969
      %v971 = vsel %vm791, %v951, %v970
      %v973 = vrot.slane %v917, 4
      %v975 = vmul.f32 %v971, %v973
      %977 = vrot.lane.b32.xlu0 %v971, 64
      %v978 = vpop.permute.xlu0 %977
      %v980 = vmul.f32 %v971, %v978
      %982 = vrot.lane.b32.xlu0 %v980, 32
      %v983 = vpop.permute.xlu0 %982
      %v985 = vadd.f32 %v975, %v983
      %v986 = vtanh.pop %v985
      %988 = vrot.lane.b32.xlu0 %v986, 64
      %v989 = vpop.permute.xlu0 %988
      %v991 = vmul.f32 %v971, %v989
      %993 = vrot.lane.b32.xlu0 %v991, 32
      %v994 = vpop.permute.xlu0 %993
      %v995 = vsel %vm640, %v994, 0
      %997 = vmatpush.msra.mxu0 0.0
      %998 = vmatpush.msra.mxu0 0.0
      %999 = vmatpush.msra.mxu0 0.0
      %1000 = vmatpush.msra.mxu0 0.0
      %1001 = vmatpush.msra.mxu0 0.0
      %1002 = vmatpush.msra.mxu0 0.0
      %1003 = vmatpush.msra.mxu0 0.0
      %1004 = vmatpush.msra.mxu0 0.0
      %1005 = vmatpush.msra.mxu0 0.0
      %1006 = vmatpush.msra.mxu0 0.0
      %1007 = vmatpush.msra.mxu0 0.0
      %1008 = vmatpush.msra.mxu0 0.0
      %1009 = vmatpush.msra.mxu0 %v786
      %1010 = vmatpush.msra.mxu0 %v785
      %1011 = vmatpush.msra.mxu0 %v784
      %1012 = vmatpush.msra.mxu0 %v783
      %1013 = vmatmul.f32.gmra.mxu0 %v995
      %v1014 = vpop.f32.mrf.mxu0
      %v1015 = vadd.f32 0.0, %v1014
      %1016 = vdwg.mxu0
      %v1018 = vrot.slane %v1015, 4
      %v1020 = vadd.f32 %v779, %v1018
      %v1021 = vtanh.pop %v1020
      %v1022 = vxor.u32 %v1020, 2147483648
      %v1023 = vmul.f32 %v1022, 1.442695
      %v1024 = vpow.pop %v1023
      %v1025 = vadd.f32 %v1024, 1.0
      %v1026 = vrcp.pop %v1025
      %v1027 = vmul.f32 %v1025, %v1026
      %v1028 = vsub.f32 1.0, %v1027
      %v1029 = vmul.f32 %v1026, %v1028
      %v1030 = vadd.f32 %v1026, %v1029
      %vm1031 = vweird.f32 %v1025
      %vm1032 = vweird.f32 %v1026
      %vm1033 = vmor %vm1031, %vm1032
      %v1034 = vsel %vm1033, %v1026, %v1030
      %v1035 = vand.u32 2147483647, %v1025
      %vm1036 = vcmp.eq.f32.partialorder %v1035, 8.507059e+37
      %v1037 = vand.u32 %v1025, 2147483648
      %v1038 = vor.u32 1.1754944e-38, %v1037
      %v1039 = vsel %vm1036, %v1038, %v1034
      %v1040 = vmul.f32 1.0, %v1039
      %v1041 = vsel %vm791, %v1021, %v1040
      %v1043 = vrot.slane %v985, 4
      %v1045 = vmul.f32 %v1041, %v1043
      %1047 = vrot.lane.b32.xlu0 %v1041, 64
      %v1048 = vpop.permute.xlu0 %1047
      %v1050 = vmul.f32 %v1041, %v1048
      %1052 = vrot.lane.b32.xlu0 %v1050, 32
      %v1053 = vpop.permute.xlu0 %1052
      %v1055 = vadd.f32 %v1045, %v1053
      %v1056 = vtanh.pop %v1055
      %1058 = vrot.lane.b32.xlu0 %v1056, 64
      %v1059 = vpop.permute.xlu0 %1058
      %v1061 = vmul.f32 %v1041, %v1059
      %v1062 = vld [vmem:[%s8] sm:$0x1]
      %v1064 = vperm.slane %v1062, 0
      %1065 = vrot.lane.b32.xlu0 %v1064, 96
      %v1066 = vpop.permute.xlu0 %1065
      %v1068 = vmul.f32 %v1061, %v1066
      %1070 = vrot.lane.b32.xlu0 %v1068, 32
      %v1071 = vpop.permute.xlu0 %1070
      %vm1073 = vcmask 258052
      %v1074 = vsel %vm1073, %v1071, 0.0
      %1075 = vadd.xlane.f32.xlu0 %v1074
      %v1076 = vpop.xlane.xlu0 %1075
      %v1077 = vld [vmem:[#allocation3] sm:$0x1]
      %v1079 = vperm.slane %v1077, 0
      %v1081 = vadd.f32 %v1076, %v1079
      %vm1082 = vcmask 4100
      %1083 = vst.msk [vmem:[%s357 - $0x4] sm:$0x10] %vm1082, %v1081
      %p1084 = scmp.lt.s32.totalorder %s23, 1
      %s1085 = scalar_select %p1084, %s23, 1
      %s1086 = scalar_lea.vmem %s10, %s1085
      // Predicated region
      $region61: #{tpu_custom_call.1} parent=59 // pred_check
        %p1087 = pneg %p256
      $region62: #{tpu_custom_call.1} parent=59 // pred_check_branch
        %1089 = sbr.rel (%p1087) target = $region64
      $region63: #{tpu_custom_call.1} parent=59 // pred_region
        _
      $region64: #{tpu_custom_call.1} parent=59 // pred_fallthru
        _
    $region60: #{tpu_custom_call.1} parent=5 // pred_fallthru
      _
    %p1090 = scmp.le.s32.totalorder 2, %s18
    // Predicated region
    $region65: #{tpu_custom_call.1} parent=5 // pred_check
      %p1091 = pneg %p1090
    $region66: #{tpu_custom_call.1} parent=5 // pred_check_branch
      %1093 = sbr.rel (%p1091) target = $region68
    $region67: #{tpu_custom_call.1} parent=5 // pred_region
      %s1094 = ssub.s32 %s18, 2
      // Predicated region
      $region69: #{tpu_custom_call.1} parent=67 // pred_check
        %p1095 = pneg %p262
      $region70: #{tpu_custom_call.1} parent=67 // pred_check_branch
        %1097 = sbr.rel (%p1095) target = $region72
      $region71: #{tpu_custom_call.1} parent=67 // pred_region
        %p1098 = scmp.lt.s32.totalorder %s24, 1
        %s1099 = scalar_select %p1098, %s24, 1
        %s1100 = scalar_lea.vmem %s10, %s1099
      $region72: #{tpu_custom_call.1} parent=67 // pred_fallthru
        _
    $region68: #{tpu_custom_call.1} parent=5 // pred_fallthru
      _
  $region6: #{tpu_custom_call.1} parent=0 // loop_footer
    %s22 = sadd.s32 1, %s18
  $region7: #{tpu_custom_call.1} parent=0 // loop_footer_branch
    %17 = sbr.rel target = $region3
  $region8: #{tpu_custom_call.1} parent=0 // loop_exit
    _

</llo_original>
